<compile_context>
chip_gen: v7x
topology: tpu7x:2x2x1
jax: 0.10.0
libtpu: 0.0.40
codegen_flags: <defaults>
</compile_context>

<pallas_src>
import functools

import jax
import jax.numpy as jnp
from jax.experimental import pallas as pl
from jax.experimental.pallas import tpu as pltpu

_LANES = 128
# Row-tile quantum: keeps TR//128 a multiple of 8 (f32 output tile) and TR a
# multiple of the 8/16/32 sublane packing of any plausible input dtype.
_ROW_TILE_QUANT = 1024
_TARGET_TILE_BYTES = 12 * 1024 * 1024     # per (double-buffered) input buffer
_VMEM_LIMIT_BYTES = 48 * 1024 * 1024      # < v7x 64 MiB physical; > v5e default
_SMALL_ROWS = 1024


def _round_up(x: int, m: int) -> int:
    return ((x + m - 1) // m) * m


# --------------------------------------------------------------------------
# Kernels
# --------------------------------------------------------------------------
def _gap_dense_kernel(x_ref, o_ref, *, inv_hw, lanes):
    """x_ref: (TR, HW) tile; o_ref: (TR//lanes, lanes) f32, lane-dense."""
    tr, hw = x_ref.shape
    x3 = x_ref[...].reshape(tr // lanes, lanes, hw)     # split major dim: free
    s = jnp.sum(x3, axis=-1, dtype=jnp.float32)         # fused widening reduce
    o_ref[...] = s * inv_hw


def _gap_col_kernel(x_ref, o_ref, *, inv_hw):
    """x_ref: (TR, HW) tile; o_ref: (TR, 1) f32 column."""
    s = jnp.sum(x_ref[...], axis=-1, keepdims=True, dtype=jnp.float32)
    o_ref[...] = s * inv_hw


# --------------------------------------------------------------------------
# Wrappers
# --------------------------------------------------------------------------
def _choose_block_rows(rows: int, hw: int, itemsize: int) -> int:
    """Row-tile size: ~_TARGET_TILE_BYTES per input buffer, budgeted with the
    hw -> 128 lane padding and the true input itemsize."""
    bytes_per_row = _round_up(hw, _LANES) * itemsize
    tr = (_TARGET_TILE_BYTES // bytes_per_row) // _ROW_TILE_QUANT * _ROW_TILE_QUANT
    tr = max(tr, _ROW_TILE_QUANT)
    return min(tr, _round_up(rows, _ROW_TILE_QUANT))


def _gap_streaming(x2d, rows: int, hw: int, tr: int, *, lane_dense: bool):
    num_blocks = pl.cdiv(rows, tr)
    itemsize = jnp.dtype(x2d.dtype).itemsize
    inv_hw = float(1.0 / hw)
    cost = pl.CostEstimate(
        flops=rows * hw + rows,
        transcendentals=0,
        bytes_accessed=rows * hw * itemsize + rows * 4,
    )
    cparams = pltpu.CompilerParams(
        dimension_semantics=("parallel",),
        vmem_limit_bytes=_VMEM_LIMIT_BYTES,
    )

    if lane_dense:
        g = tr // _LANES
        out = pl.pallas_call(
            functools.partial(_gap_dense_kernel, inv_hw=inv_hw, lanes=_LANES),
            out_shape=jax.ShapeDtypeStruct((num_blocks * g, _LANES), jnp.float32),
            grid_spec=pltpu.PrefetchScalarGridSpec(
                num_scalar_prefetch=0,
                grid=(num_blocks,),
                in_specs=[pl.BlockSpec((tr, hw), lambda i: (i, 0))],
                out_specs=pl.BlockSpec((g, _LANES), lambda i: (i, 0)),
            ),
            compiler_params=cparams,
            cost_estimate=cost,
        )(x2d)
        # Flattened (block, local_row) layout maps position r -> row r; the
        # slice discards the ragged final block's garbage rows (>= rows).
        return out.reshape(-1)[:rows]

    out = pl.pallas_call(
        functools.partial(_gap_col_kernel, inv_hw=inv_hw),
        out_shape=jax.ShapeDtypeStruct((num_blocks * tr, 1), jnp.float32),
        grid_spec=pltpu.PrefetchScalarGridSpec(
            num_scalar_prefetch=0,
            grid=(num_blocks,),
            in_specs=[pl.BlockSpec((tr, hw), lambda i: (i, 0))],
            out_specs=pl.BlockSpec((tr, 1), lambda i: (i, 0)),
        ),
        compiler_params=cparams,
        cost_estimate=cost,
    )(x2d)
    return out[:rows, 0]


def _gap_single_block(x2d, rows: int, hw: int):
    """Whole problem in one VMEM block (tiny inputs); block == array, no masking."""
    out = pl.pallas_call(
        functools.partial(_gap_col_kernel, inv_hw=float(1.0 / hw)),
        out_shape=jax.ShapeDtypeStruct((rows, 1), jnp.float32),
        grid_spec=pltpu.PrefetchScalarGridSpec(
            num_scalar_prefetch=0,
            grid=(1,),
            in_specs=[pl.BlockSpec((rows, hw), lambda i: (0, 0))],
            out_specs=pl.BlockSpec((rows, 1), lambda i: (0, 0)),
        ),
        compiler_params=pltpu.CompilerParams(
            dimension_semantics=("arbitrary",),
            vmem_limit_bytes=_VMEM_LIMIT_BYTES,
        ),
    )(x2d)
    return out[:, 0]


def global_avg_pool2d(x: jax.Array) -> jax.Array:
    """x: (N, C, H, W) -> (N, C), mean over spatial dims (adaptive_avg_pool2d(x, 1))."""
    N, C, H, W = x.shape
    rows, hw = N * C, H * W
    x2d = x.reshape(rows, hw)                  # free view of contiguous NCHW

    if rows < _SMALL_ROWS:
        means = _gap_single_block(x2d, rows, hw)
    else:
        tr = _choose_block_rows(rows, hw, jnp.dtype(x.dtype).itemsize)
        try:
            means = _gap_streaming(x2d, rows, hw, tr, lane_dense=True)
        except Exception:
            # Robustness fallback: if this Mosaic build rejects the in-kernel
            # (TR,HW)->(TR//128,128,HW) reduce/relayout, fall back to the
            # (correct, masked-store) column-output variant instead of failing.
            means = _gap_streaming(x2d, rows, hw, tr, lane_dense=False)

    return means.astype(x.dtype).reshape(N, C)


if __name__ == "__main__":
    key = jax.random.PRNGKey(0)
    # Shapes exercise:
    #   (2, 4, 16, 16)   required small example; single-block path, tiny N*C
    #   (2, 512, 7, 7)   streaming lane-dense path, 49 -> 128 lane padding
    #   (16, 2048, 7, 7) streaming path with grid > 1 and a ragged final block
    shapes = [(2, 4, 16, 16), (2, 512, 7, 7), (16, 2048, 7, 7)]
    for i, shp in enumerate(shapes):
        x = jax.random.normal(jax.random.fold_in(key, i), shp, dtype=jnp.float32)
        y = global_avg_pool2d(x)
        jax.block_until_ready(y)
        y_ref = jnp.mean(x, axis=(2, 3))
        assert y.shape == (shp[0], shp[1]), (y.shape, shp)
        assert jnp.allclose(y, y_ref, atol=1e-5, rtol=1e-5), shp
    print("KERNEL_OK")
</pallas_src>

<mosaic_0001>
module attributes {stable_mosaic.version = 11 : i64} {
  func.func @_gap_col_kernel(%arg0: i32, %arg1: memref<8x256xf32, #tpu.memory_space<vmem>>, %arg2: memref<8x1xf32, #tpu.memory_space<vmem>>) attributes {dimension_semantics = [#tpu.dimension_semantics<arbitrary>], iteration_bounds = array<i64: 1>, scalar_prefetch = 0 : i64, scratch_operands = 0 : i64, tpu.core_type = #tpu.core_type<tc>, window_params = [{pipeline_mode = #tpu.pipeline_mode<synchronous>, transform_indices = @transform_0, window_bounds = array<i64: 8, 256>}, {pipeline_mode = #tpu.pipeline_mode<synchronous>, transform_indices = @transform_1, window_bounds = array<i64: 8, 1>}]} {
    %c0 = arith.constant 0 : index
    %c0_0 = arith.constant 0 : index
    %0 = vector.load %arg1[%c0, %c0_0] : memref<8x256xf32, #tpu.memory_space<vmem>>, vector<8x256xf32>
    %cst = arith.constant dense<0.000000e+00> : vector<8xf32>
    %1 = vector.multi_reduction <add>, %0, %cst [1] : vector<8x256xf32> to vector<8xf32>
    %2 = vector.shape_cast %1 : vector<8xf32> to vector<8x1xf32>
    %cst_1 = arith.constant 3.906250e-03 : f32
    %3 = vector.broadcast %cst_1 : f32 to vector<8x1xf32>
    %4 = arith.mulf %2, %3 : vector<8x1xf32>
    %c0_2 = arith.constant 0 : index
    %c0_3 = arith.constant 0 : index
    %5 = vector.load %arg2[%c0_2, %c0_3] : memref<8x1xf32, #tpu.memory_space<vmem>>, vector<8x1xf32>
    tpu.vector_store %arg2[%c0_2, %c0_3], %4 {strides = array<i32>} : memref<8x1xf32, #tpu.memory_space<vmem>>, vector<8x1xf32>,
    return
  }
  func.func @transform_0(%arg0: i32) -> (i32, i32) {
    %c0_i32 = arith.constant 0 : i32
    %c0_i32_0 = arith.constant 0 : i32
    %c0_i32_1 = arith.constant 0 : i32
    return %c0_i32, %c0_i32_0 : i32, i32
  }
  func.func @transform_1(%arg0: i32) -> (i32, i32) {
    %c0_i32 = arith.constant 0 : i32
    %c0_i32_0 = arith.constant 0 : i32
    %c0_i32_1 = arith.constant 0 : i32
    return %c0_i32, %c0_i32_0 : i32, i32
  }
}

</mosaic_0001>

<llo_original>
// kernel: tpu_custom_call.1
$region0: #{tpu_custom_call.1}
  #allocation0 [shape = 'u32[]', space=smem, size = 0x4, offset = 0x4, fixed_abs, tag = 'smem constant byte address 0x4 - core index']
  #allocation1 [shape = 'u32[144,128]{1,0:T(1,128)}', space=vmem, size = 0x12000, scoped, tag = 'internal scratch']
  %s0 = inlined_call_operand.hbm [shape: f32[8,256], index: 0, kind: input, shape index: {}]
  %s1 = inlined_call_operand.vmem [shape: f32[8,1], index: 1, kind: output, shape index: {}]
  %s2 = sld [smem:[#allocation0]]
  $region18: #{tpu_custom_call.1} parent=0
    _
  %s4 = ssub.s32 1, %s2
  %s5 = scalar_select 0, %s4, %s2
  $region1: #{tpu_custom_call.1} parent=0
    #allocation2 [shape = 'u8[8192]{0}', space=vmem, size = 0x2000, scoped, tag = 'input window, operand 0, single buffered']
    #allocation3 [shape = 's32[1]{0}', space=sflag, size = 0x4, scoped, tag = 'scoped memory for tpu_custom_call.1']
    %6 = vsyncpa [#allocation3], 0
    // Predicated region
    $region2: #{tpu_custom_call.1} parent=1 // pred_check
      _
    $region3: #{tpu_custom_call.1} parent=1 // pred_check_branch
      %8 = sbr.rel (0) target = $region5
    $region4: #{tpu_custom_call.1} parent=1 // pred_region
      %s10 = ssub.s32 256, 256
      %11 = vsyncadd [#allocation3], %s10
      %s13 = sshll.u32 [#allocation2], 4
      %s14 = int_to_ptr.vmem [resolvable:$true] %s13
      %16 = dma.hbm_to_vmem [thread:$0]  %s0, 256, %s14, [#allocation3]
    $region5: #{tpu_custom_call.1} parent=1 // pred_fallthru
      _
    // Predicated region
    $region6: #{tpu_custom_call.1} parent=1 // pred_check
      _
    $region7: #{tpu_custom_call.1} parent=1 // pred_check_branch
      %18 = sbr.rel (0) target = $region9
    $region8: #{tpu_custom_call.1} parent=1 // pred_region
      %19 = dma.done [#allocation3], 256
    $region9: #{tpu_custom_call.1} parent=1 // pred_fallthru
      _
    %v20 = vld [vmem:[#allocation2] sm:$0xff]
    %v21 = vld [vmem:[#allocation2 + $0x8] sm:$0xff]
    %v22 = vadd.f32 %v20, %v21
    %23 = vadd.xlane.f32.xlu0 %v22
    %v24 = vpop.xlane.xlu0 %23
    %v25 = vmul.f32 %v24, 0.00390625
    %vm26 = vcmask 7168
    %27 = vst.msk [vmem:[%s1] sm:$0xff] %vm26, %v25
    // Predicated region
    $region10: #{tpu_custom_call.1} parent=1 // pred_check
      _
    $region11: #{tpu_custom_call.1} parent=1 // pred_check_branch
      %29 = sbr.rel (0) target = $region13
    $region12: #{tpu_custom_call.1} parent=1 // pred_region
      _
    $region13: #{tpu_custom_call.1} parent=1 // pred_fallthru
      _
    // Predicated region
    $region14: #{tpu_custom_call.1} parent=1 // pred_check
      _
    $region15: #{tpu_custom_call.1} parent=1 // pred_check_branch
      %31 = sbr.rel (0) target = $region17
    $region16: #{tpu_custom_call.1} parent=1 // pred_region
      _
    $region17: #{tpu_custom_call.1} parent=1 // pred_fallthru
      _
    %32 = vsyncpa [#allocation3], 1

</llo_original>
